<compile_context>
chip_gen: v7x
topology: tpu7x:2x2x1
jax: 0.10.0
libtpu: 0.0.40
codegen_flags: <defaults>
</compile_context>

<pallas_src>
import jax
import jax.numpy as jnp
from jax import lax
from jax.experimental import pallas as pl
from jax.experimental.pallas import tpu as pltpu


def _linear_kernel(x_ref, w_ref, b_ref, o_ref, acc_ref):
    # x_ref: (tm, tk)   w_ref: (tn, tk)   b_ref: (1, tn)
    # o_ref: (tm, tn)   acc_ref: (tm, tn) f32 scratch, resident across K
    k = pl.program_id(2)

    # Contract the shared In axis of x (axis 1) and W (axis 1): the PyTorch
    # (Out, In) weight layout is consumed directly, no transpose emitted.
    partial = lax.dot_general(
        x_ref[...],
        w_ref[...],
        dimension_numbers=(((1,), (1,)), ((), ())),
        preferred_element_type=jnp.float32,
    )

    @pl.when(k == 0)
    def _():
        # Assign on the first K step: avoids a full (tm, tn) zero-fill store
        # per output tile (one fewer vst stream; matters most on v5e).
        acc_ref[...] = partial

    @pl.when(k > 0)
    def _():
        acc_ref[...] += partial

    @pl.when(k == pl.num_programs(2) - 1)
    def _():
        # Single fused epilogue pass: bias add + cast + store.
        o_ref[...] = (acc_ref[...] + b_ref[...]).astype(o_ref.dtype)


def _pick_tile(dim: int, desired: int, align: int) -> int:
    """Largest tile <= desired that divides `dim` and is a multiple of `align`.

    Falls back to the full dimension (always a legal block extent, even when
    unaligned), so the wrapper never materializes padded copies in HBM.
    """
    if dim <= desired:
        return dim
    if dim % align == 0:
        start = (min(desired, dim) // align) * align
        for t in range(start, 0, -align):
            if dim % t == 0:
                return t
    return dim


def _vmem_limit_bytes() -> int:
    # v5e/v6e: 128 MiB physical VMEM; v7x: 64 MiB per TensorCore. Use ~75% of
    # what this chip reports (96 MiB on v5e/v6e, 48 MiB on v7x); fall back to
    # the v7x-safe 48 MiB if the query is unavailable.
    try:
        cap = int(pltpu.get_tpu_info().vmem_capacity_bytes)
    except Exception:
        cap = 64 * 1024 * 1024
    return max(32 * 1024 * 1024, cap * 3 // 4)


def linear_forward(x, weight, bias, *, tm=512, tn=512, tk=1024):
    """y = x @ weight.T + bias (PyTorch nn.Linear convention).

    x:      (B, In)   float32
    weight: (Out, In) float32
    bias:   (Out,)    float32
    """
    B, In = x.shape
    Out, In_w = weight.shape
    assert In == In_w and bias.shape == (Out,)

    # Tiles that divide the true dims exactly (or equal the full dim): no
    # wrapper-side jnp.pad and no padded-output slice. Lane axes (tn, tk)
    # align to 128, the sublane axis (tm) to 8.
    tm = _pick_tile(B, tm, 8)
    tn = _pick_tile(Out, tn, 128)
    tk = _pick_tile(In, tk, 128)
    gm, gn, gk = B // tm, Out // tn, In // tk

    # v7x has 2 TensorCores per chip: make sure some "parallel" grid axis
    # carries >= 2 blocks when the problem allows it, so a TC isn't idle.
    if gm * gn == 1:
        if Out >= 256 and Out % 128 == 0:
            t = _pick_tile(Out, max(tn // 2, 128), 128)
            if Out // t >= 2:
                tn, gn = t, Out // t
        if gm * gn == 1 and B >= 16 and B % 8 == 0:
            t = _pick_tile(B, max(tm // 2, 8), 8)
            if B // t >= 2:
                tm, gm = t, B // t

    grid = (gm, gn, gk)

    # Advisory cost: bytes_accessed includes re-streaming (x read gn times,
    # W read gm times with this loop order).
    cost = pl.CostEstimate(
        flops=2 * B * Out * In,
        transcendentals=0,
        bytes_accessed=4 * (B * In * gn + Out * In * gm + B * Out + Out),
    )

    return pl.pallas_call(
        _linear_kernel,
        out_shape=jax.ShapeDtypeStruct((B, Out), x.dtype),
        grid_spec=pltpu.PrefetchScalarGridSpec(
            num_scalar_prefetch=0,
            grid=grid,
            in_specs=[
                pl.BlockSpec((tm, tk), lambda i, j, k: (i, k)),   # x tile
                pl.BlockSpec((tn, tk), lambda i, j, k: (j, k)),   # W tile (Out, In)
                pl.BlockSpec((1, tn), lambda i, j, k: (0, j)),    # bias (K-resident)
            ],
            out_specs=pl.BlockSpec((tm, tn), lambda i, j, k: (i, j)),
            scratch_shapes=[pltpu.VMEM((tm, tn), jnp.float32)],
        ),
        compiler_params=pltpu.CompilerParams(
            dimension_semantics=("parallel", "parallel", "arbitrary"),
            vmem_limit_bytes=_vmem_limit_bytes(),
        ),
        cost_estimate=cost,
    )(x, weight, bias.reshape(1, Out))


if __name__ == "__main__":
    key = jax.random.PRNGKey(0)
    kx, kw, kb, kx2, kw2, kb2, kx3, kw3, kb3 = jax.random.split(key, 9)

    # --- demo shapes consistent with nn.Linear(32, 8), batch of 8 -----------
    batch, in_features, out_features = 8, 32, 8
    x = jax.random.normal(kx, (batch, in_features), dtype=jnp.float32)
    weight = jax.random.normal(kw, (out_features, in_features), dtype=jnp.float32) * 0.1
    bias = jax.random.normal(kb, (out_features,), dtype=jnp.float32) * 0.1

    y = linear_forward(x, weight, bias)
    jax.block_until_ready(y)
    y_ref = x @ weight.T + bias
    assert y.shape == (batch, out_features)
    assert jnp.allclose(y, y_ref, atol=1e-5, rtol=1e-5)

    # --- multi-step (M, N, K) grid; tiles divide the true dims --------------
    B2, In2, Out2 = 16, 384, 256
    x2 = jax.random.normal(kx2, (B2, In2), dtype=jnp.float32)
    w2 = jax.random.normal(kw2, (Out2, In2), dtype=jnp.float32) * 0.05
    b2 = jax.random.normal(kb2, (Out2,), dtype=jnp.float32) * 0.05

    y2 = linear_forward(x2, w2, b2, tm=8, tn=128, tk=128)   # grid = (2, 2, 3)
    jax.block_until_ready(y2)
    y2_ref = x2 @ w2.T + b2
    assert y2.shape == (B2, Out2)
    assert jnp.allclose(y2, y2_ref, atol=1e-4, rtol=1e-4)

    # --- ragged dims: full-extent blocks, still no padding copies -----------
    B3, In3, Out3 = 12, 96, 40
    x3 = jax.random.normal(kx3, (B3, In3), dtype=jnp.float32)
    w3 = jax.random.normal(kw3, (Out3, In3), dtype=jnp.float32) * 0.05
    b3 = jax.random.normal(kb3, (Out3,), dtype=jnp.float32) * 0.05

    y3 = linear_forward(x3, w3, b3)                          # grid = (1, 1, 1)
    jax.block_until_ready(y3)
    y3_ref = x3 @ w3.T + b3
    assert y3.shape == (B3, Out3)
    assert jnp.allclose(y3, y3_ref, atol=1e-4, rtol=1e-4)

    print("KERNEL_OK")
</pallas_src>

<mosaic_0001>
module attributes {stable_mosaic.version = 11 : i64} {
  func.func @_linear_kernel(%arg0: i32, %arg1: i32, %arg2: i32, %arg3: memref<8x32xf32, #tpu.memory_space<vmem>>, %arg4: memref<8x32xf32, #tpu.memory_space<vmem>>, %arg5: memref<1x8xf32, #tpu.memory_space<vmem>>, %arg6: memref<8x8xf32, #tpu.memory_space<vmem>>, %arg7: memref<8x8xf32, #tpu.memory_space<vmem>>) attributes {dimension_semantics = [#tpu.dimension_semantics<parallel>, #tpu.dimension_semantics<parallel>, #tpu.dimension_semantics<arbitrary>], iteration_bounds = array<i64: 1, 1, 1>, scalar_prefetch = 0 : i64, scratch_operands = 1 : i64, tpu.core_type = #tpu.core_type<tc>, window_params = [{transform_indices = @transform_0, window_bounds = array<i64: 8, 32>}, {transform_indices = @transform_1, window_bounds = array<i64: 8, 32>}, {transform_indices = @transform_2, window_bounds = array<i64: 1, 8>}, {transform_indices = @transform_3, window_bounds = array<i64: 8, 8>}]} {
    %c0 = arith.constant 0 : index
    %c0_0 = arith.constant 0 : index
    %0 = vector.load %arg3[%c0, %c0_0] : memref<8x32xf32, #tpu.memory_space<vmem>>, vector<8x32xf32>
    %c0_1 = arith.constant 0 : index
    %c0_2 = arith.constant 0 : index
    %1 = vector.load %arg4[%c0_1, %c0_2] : memref<8x32xf32, #tpu.memory_space<vmem>>, vector<8x32xf32>
    %cst = arith.constant dense<0.000000e+00> : vector<8x8xf32>
    %2 = tpu.matmul %0, %1, %cst {dimension_numbers = #tpu.dot_dimension_numbers<[1], [1], [0], [0], [0, 0, 1, 0], [], []>} : vector<8x32xf32>, vector<8x32xf32>, vector<8x8xf32> -> vector<8x8xf32>
    %c0_i32 = arith.constant 0 : i32
    %3 = arith.cmpi eq, %arg2, %c0_i32 : i32
    %4 = arith.extui %3 : i1 to i32
    %c0_i32_3 = arith.constant 0 : i32
    %5 = arith.cmpi ne, %4, %c0_i32_3 : i32
    scf.if %5 {
      %c0_8 = arith.constant 0 : index
      %c0_9 = arith.constant 0 : index
      %12 = vector.load %arg7[%c0_8, %c0_9] : memref<8x8xf32, #tpu.memory_space<vmem>>, vector<8x8xf32>
      tpu.vector_store %arg7[%c0_8, %c0_9], %2 {strides = array<i32>} : memref<8x8xf32, #tpu.memory_space<vmem>>, vector<8x8xf32>,
    } else {
    }
    %c0_i32_4 = arith.constant 0 : i32
    %6 = arith.cmpi sgt, %arg2, %c0_i32_4 : i32
    %7 = arith.extui %6 : i1 to i32
    %c0_i32_5 = arith.constant 0 : i32
    %8 = arith.cmpi ne, %7, %c0_i32_5 : i32
    scf.if %8 {
      %c0_8 = arith.constant 0 : index
      %c0_9 = arith.constant 0 : index
      %12 = vector.load %arg7[%c0_8, %c0_9] : memref<8x8xf32, #tpu.memory_space<vmem>>, vector<8x8xf32>
      %13 = arith.addf %12, %2 : vector<8x8xf32>
      %c0_10 = arith.constant 0 : index
      %c0_11 = arith.constant 0 : index
      %14 = vector.load %arg7[%c0_10, %c0_11] : memref<8x8xf32, #tpu.memory_space<vmem>>, vector<8x8xf32>
      tpu.vector_store %arg7[%c0_10, %c0_11], %13 {strides = array<i32>} : memref<8x8xf32, #tpu.memory_space<vmem>>, vector<8x8xf32>,
    } else {
    }
    %c0_i32_6 = arith.constant 0 : i32
    %9 = arith.cmpi eq, %arg2, %c0_i32_6 : i32
    %10 = arith.extui %9 : i1 to i32
    %c0_i32_7 = arith.constant 0 : i32
    %11 = arith.cmpi ne, %10, %c0_i32_7 : i32
    scf.if %11 {
      %c0_8 = arith.constant 0 : index
      %c0_9 = arith.constant 0 : index
      %12 = vector.load %arg7[%c0_8, %c0_9] : memref<8x8xf32, #tpu.memory_space<vmem>>, vector<8x8xf32>
      %c0_10 = arith.constant 0 : index
      %c0_11 = arith.constant 0 : index
      %13 = vector.load %arg5[%c0_10, %c0_11] : memref<1x8xf32, #tpu.memory_space<vmem>>, vector<1x8xf32>
      %14 = vector.broadcast %13 : vector<1x8xf32> to vector<8x8xf32>
      %15 = arith.addf %12, %14 : vector<8x8xf32>
      %c0_12 = arith.constant 0 : index
      %c0_13 = arith.constant 0 : index
      %16 = vector.load %arg6[%c0_12, %c0_13] : memref<8x8xf32, #tpu.memory_space<vmem>>, vector<8x8xf32>
      tpu.vector_store %arg6[%c0_12, %c0_13], %15 {strides = array<i32>} : memref<8x8xf32, #tpu.memory_space<vmem>>, vector<8x8xf32>,
    } else {
    }
    return
  }
  func.func @transform_0(%arg0: i32, %arg1: i32, %arg2: i32) -> (i32, i32) {
    %c0_i32 = arith.constant 0 : i32
    return %arg0, %arg2 : i32, i32
  }
  func.func @transform_1(%arg0: i32, %arg1: i32, %arg2: i32) -> (i32, i32) {
    %c0_i32 = arith.constant 0 : i32
    return %arg1, %arg2 : i32, i32
  }
  func.func @transform_2(%arg0: i32, %arg1: i32, %arg2: i32) -> (i32, i32) {
    %c0_i32 = arith.constant 0 : i32
    %c0_i32_0 = arith.constant 0 : i32
    return %c0_i32, %arg1 : i32, i32
  }
  func.func @transform_3(%arg0: i32, %arg1: i32, %arg2: i32) -> (i32, i32) {
    %c0_i32 = arith.constant 0 : i32
    return %arg0, %arg1 : i32, i32
  }
}

</mosaic_0001>

<llo_original>
// kernel: tpu_custom_call.1
$region0: #{tpu_custom_call.1}
  #allocation0 [shape = 'u32[]', space=smem, size = 0x4, offset = 0x4, fixed_abs, tag = 'smem constant byte address 0x4 - core index']
  #allocation1 [shape = 'u32[144,128]{1,0:T(1,128)}', space=vmem, size = 0x12000, scoped, tag = 'internal scratch']
  #allocation2 [shape = 'f32[8,8]{1,0:T(8,128)}', space=vmem, size = 0x1000, scoped, tag = 'scratch operand']
  %s0 = inlined_call_operand.hbm [shape: f32[8,32], index: 0, kind: input, shape index: {}]
  %s1 = inlined_call_operand.hbm [shape: f32[8,32], index: 1, kind: input, shape index: {}]
  %s2 = inlined_call_operand.vmem [shape: f32[1,8], index: 2, kind: input, shape index: {}]
  %s3 = inlined_call_operand.hbm [shape: f32[8,8], index: 3, kind: output, shape index: {}]
  %s4 = sld [smem:[#allocation0]]
  $region42: #{tpu_custom_call.1} parent=0
    _
  %s6 = ssub.s32 1, %s4
  %s7 = scalar_select 0, %s6, %s4
  $region1: #{tpu_custom_call.1} parent=0
    #allocation3 [shape = 'u8[4096]{0}', space=vmem, size = 0x1000, scoped, tag = 'input window, operand 0, single buffered']
    #allocation4 [shape = 's32[1]{0}', space=sflag, size = 0x4, scoped, tag = 'scoped memory for tpu_custom_call.1']
    #allocation5 [shape = 's32[1]{0}', space=sflag, size = 0x4, scoped, tag = 'scoped memory for tpu_custom_call.1']
    #allocation6 [shape = 'u8[4096]{0}', space=vmem, size = 0x1000, scoped, tag = 'input window, operand 1, single buffered']
    #allocation7 [shape = 's32[1]{0}', space=sflag, size = 0x4, scoped, tag = 'scoped memory for tpu_custom_call.1']
    #allocation8 [shape = 'u8[4096]{0}', space=vmem, size = 0x1000, scoped, tag = 'output window, operand 0, single buffered']
    %8 = vsyncpa [#allocation4], 0
    %9 = vsyncpa [#allocation7], 0
    %10 = vsyncpa [#allocation5], 0
    // Predicated region
    $region2: #{tpu_custom_call.1} parent=1 // pred_check
      _
    $region3: #{tpu_custom_call.1} parent=1 // pred_check_branch
      %12 = sbr.rel (0) target = $region5
    $region4: #{tpu_custom_call.1} parent=1 // pred_region
      %s14 = ssub.s32 128, 128
      %15 = vsyncadd [#allocation4], %s14
      %s17 = sshll.u32 [#allocation3], 4
      %s18 = int_to_ptr.vmem [resolvable:$true] %s17
      %20 = dma.hbm_to_vmem [thread:$0]  %s0, 128, %s18, [#allocation4]
    $region5: #{tpu_custom_call.1} parent=1 // pred_fallthru
      _
    // Predicated region
    $region6: #{tpu_custom_call.1} parent=1 // pred_check
      _
    $region7: #{tpu_custom_call.1} parent=1 // pred_check_branch
      %22 = sbr.rel (0) target = $region9
    $region8: #{tpu_custom_call.1} parent=1 // pred_region
      %s24 = ssub.s32 128, 128
      %25 = vsyncadd [#allocation7], %s24
      %s27 = sshll.u32 [#allocation6], 4
      %s28 = int_to_ptr.vmem [resolvable:$true] %s27
      %30 = dma.hbm_to_vmem [thread:$0]  %s1, 128, %s28, [#allocation7]
    $region9: #{tpu_custom_call.1} parent=1 // pred_fallthru
      _
    // Predicated region
    $region10: #{tpu_custom_call.1} parent=1 // pred_check
      _
    $region11: #{tpu_custom_call.1} parent=1 // pred_check_branch
      %32 = sbr.rel (0) target = $region13
    $region12: #{tpu_custom_call.1} parent=1 // pred_region
      _
    $region13: #{tpu_custom_call.1} parent=1 // pred_fallthru
      _
    // Predicated region
    $region14: #{tpu_custom_call.1} parent=1 // pred_check
      _
    $region15: #{tpu_custom_call.1} parent=1 // pred_check_branch
      %34 = sbr.rel (0) target = $region17
    $region16: #{tpu_custom_call.1} parent=1 // pred_region
      %35 = dma.done [#allocation4], 128
    $region17: #{tpu_custom_call.1} parent=1 // pred_fallthru
      _
    // Predicated region
    $region18: #{tpu_custom_call.1} parent=1 // pred_check
      _
    $region19: #{tpu_custom_call.1} parent=1 // pred_check_branch
      %37 = sbr.rel (0) target = $region21
    $region20: #{tpu_custom_call.1} parent=1 // pred_region
      %38 = dma.done [#allocation7], 128
    $region21: #{tpu_custom_call.1} parent=1 // pred_fallthru
      _
    %v39 = vld [vmem:[#allocation3] sm:$0xff]
    %v40 = vld [vmem:[#allocation6] sm:$0xff]
    %vm41 = vcmask 261120
    %v43 = vsel %vm41, %v39, 0
    %v46 = vsel %vm41, %v40, 0
    %48 = vmatprep.subr.mxu0 0.0
    %49 = vmatpush1.xpose.msra.mxu0 %v46
    %50 = vmatprep.subr.mxu0 0.0
    %51 = vmatpush1.xpose.msra.mxu0 0.0
    %52 = vmatprep.subr.mxu0 0.0
    %53 = vmatpush1.xpose.msra.mxu0 0.0
    %54 = vmatprep.subr.mxu0 0.0
    %55 = vmatpush1.xpose.msra.mxu0 0.0
    %56 = vmatprep.subr.mxu0 0.0
    %57 = vmatpush1.xpose.msra.mxu0 0.0
    %58 = vmatprep.subr.mxu0 0.0
    %59 = vmatpush1.xpose.msra.mxu0 0.0
    %60 = vmatprep.subr.mxu0 0.0
    %61 = vmatpush1.xpose.msra.mxu0 0.0
    %62 = vmatprep.subr.mxu0 0.0
    %63 = vmatpush1.xpose.msra.mxu0 0.0
    %64 = vmatprep.subr.mxu0 0.0
    %65 = vmatpush1.xpose.msra.mxu0 0.0
    %66 = vmatprep.subr.mxu0 0.0
    %67 = vmatpush1.xpose.msra.mxu0 0.0
    %68 = vmatprep.subr.mxu0 0.0
    %69 = vmatpush1.xpose.msra.mxu0 0.0
    %70 = vmatprep.subr.mxu0 0.0
    %71 = vmatpush1.xpose.msra.mxu0 0.0
    %72 = vmatprep.subr.mxu0 0.0
    %73 = vmatpush1.xpose.msra.mxu0 0.0
    %74 = vmatprep.subr.mxu0 0.0
    %75 = vmatpush1.xpose.msra.mxu0 0.0
    %76 = vmatprep.subr.mxu0 0.0
    %77 = vmatpush1.xpose.msra.mxu0 0.0
    %78 = vmatprep.subr.mxu0 0.0
    %79 = vmatpush1.xpose.msra.mxu0 0.0
    %80 = vmatprep.subr.mxu0 0.0
    %81 = vmatpush1.xpose.msra.mxu0 0.0
    %82 = vmatprep.subr.mxu0 0.0
    %83 = vmatpush1.xpose.msra.mxu0 0.0
    %84 = vmatprep.subr.mxu0 0.0
    %85 = vmatpush1.xpose.msra.mxu0 0.0
    %86 = vmatprep.subr.mxu0 0.0
    %87 = vmatpush1.xpose.msra.mxu0 0.0
    %88 = vmatprep.subr.mxu0 0.0
    %89 = vmatpush1.xpose.msra.mxu0 0.0
    %90 = vmatprep.subr.mxu0 0.0
    %91 = vmatpush1.xpose.msra.mxu0 0.0
    %92 = vmatprep.subr.mxu0 0.0
    %93 = vmatpush1.xpose.msra.mxu0 0.0
    %94 = vmatprep.subr.mxu0 0.0
    %95 = vmatpush1.xpose.msra.mxu0 0.0
    %96 = vmatprep.subr.mxu0 0.0
    %97 = vmatpush1.xpose.msra.mxu0 0.0
    %98 = vmatprep.subr.mxu0 0.0
    %99 = vmatpush1.xpose.msra.mxu0 0.0
    %100 = vmatprep.subr.mxu0 0.0
    %101 = vmatpush1.xpose.msra.mxu0 0.0
    %102 = vmatprep.subr.mxu0 0.0
    %103 = vmatpush1.xpose.msra.mxu0 0.0
    %104 = vmatprep.subr.mxu0 0.0
    %105 = vmatpush1.xpose.msra.mxu0 0.0
    %106 = vmatprep.subr.mxu0 0.0
    %107 = vmatpush1.xpose.msra.mxu0 0.0
    %108 = vmatprep.subr.mxu0 0.0
    %109 = vmatpush1.xpose.msra.mxu0 0.0
    %110 = vmatprep.subr.mxu0 0.0
    %111 = vmatpush1.xpose.msra.mxu0 0.0
    %112 = vmatprep.mubr.f32.mxu0 0.0
    %113 = vmatmul.mubr.f32.gmra.mrb[0].mxu0 %v43
    %v114 = vpop.f32.mrb[0].mxu0
    %v115 = vadd.f32 0.0, %v114
    %v116 = vpop.f32.mrb[0].mxu0
    %117 = vdwg.mxu0
    %p118 = scmp.eq.s32.totalorder 0, 0
    // Predicated region
    $region22: #{tpu_custom_call.1} parent=1 // pred_check
      %p119 = pneg %p118
    $region23: #{tpu_custom_call.1} parent=1 // pred_check_branch
      %121 = sbr.rel (%p119) target = $region25
    $region24: #{tpu_custom_call.1} parent=1 // pred_region
      %vm122 = vcmask 64512
      %123 = vst.msk [vmem:[#allocation2] sm:$0xff] %vm122, %v115
    $region25: #{tpu_custom_call.1} parent=1 // pred_fallthru
      _
    %p124 = scmp.gt.s32.totalorder 0, 0
    // Predicated region
    $region26: #{tpu_custom_call.1} parent=1 // pred_check
      %p125 = pneg %p124
    $region27: #{tpu_custom_call.1} parent=1 // pred_check_branch
      %127 = sbr.rel (%p125) target = $region29
    $region28: #{tpu_custom_call.1} parent=1 // pred_region
      %v128 = vld [vmem:[#allocation2] sm:$0xff]
      %v129 = vadd.f32 %v128, %v115
      %vm130 = vcmask 64512
      %131 = vst.msk [vmem:[#allocation2] sm:$0xff] %vm130, %v129
    $region29: #{tpu_custom_call.1} parent=1 // pred_fallthru
      _
    // Predicated region
    $region30: #{tpu_custom_call.1} parent=1 // pred_check
      %p132 = pneg %p118
    $region31: #{tpu_custom_call.1} parent=1 // pred_check_branch
      %134 = sbr.rel (%p132) target = $region33
    $region32: #{tpu_custom_call.1} parent=1 // pred_region
      %v135 = vld [vmem:[#allocation2] sm:$0xff]
      %v136 = vld [vmem:[%s2] sm:$0x1]
      %v138 = vlaneseq
      %v139 = vshrl.u32 %v138, 7
      %v140 = vsub.s32 0, %v139
      %v141 = vrot.slane %v136, %v140
      %v143 = vadd.f32 %v135, %v141
      %vm144 = vcmask 64512
      %145 = vst.msk [vmem:[#allocation8] sm:$0xff] %vm144, %v143
    $region33: #{tpu_custom_call.1} parent=1 // pred_fallthru
      _
    // Predicated region
    $region34: #{tpu_custom_call.1} parent=1 // pred_check
      _
    $region35: #{tpu_custom_call.1} parent=1 // pred_check_branch
      %147 = sbr.rel (0) target = $region37
    $region36: #{tpu_custom_call.1} parent=1 // pred_region
      %s149 = ssub.s32 128, 128
      %150 = vsyncadd [#allocation5], %s149
      %s152 = sshll.u32 [#allocation8], 4
      %s153 = int_to_ptr.vmem [resolvable:$true] %s152
      %155 = dma.vmem_to_hbm [thread:$0]  %s153, 128, %s3, [#allocation5]
    $region37: #{tpu_custom_call.1} parent=1 // pred_fallthru
      _
    // Predicated region
    $region38: #{tpu_custom_call.1} parent=1 // pred_check
      _
    $region39: #{tpu_custom_call.1} parent=1 // pred_check_branch
      %157 = sbr.rel (0) target = $region41
    $region40: #{tpu_custom_call.1} parent=1 // pred_region
      %158 = dma.done [#allocation5], 128
    $region41: #{tpu_custom_call.1} parent=1 // pred_fallthru
      _
    %159 = vsyncpa [#allocation4], 1
    %160 = vsyncpa [#allocation7], 1
    %161 = vsyncpa [#allocation5], 1

</llo_original>
